<compile_context>
chip_gen: v6e
topology: v6e:2x2x1
jax: 0.10.0
libtpu: 0.0.40
codegen_flags: <defaults>
</compile_context>

<pallas_src>
import functools
import math

import jax
import jax.numpy as jnp
import numpy as np
from jax.experimental import pallas as pl
from jax.experimental.pallas import tpu as pltpu


# --------------------------------------------------------------------------
# Kernel A: fused QKV projection.
#   x tile (TS, H) bf16  @  Wqkv (H, 3H) bf16  -> (3H, TS) f32 in ONE matmul
#   (computed transposed so the result is already "feature-major"), then the
#   per-head (d, TS) slabs are stored head-major into q^T / k^T / v^T.
# --------------------------------------------------------------------------
def qkv_proj_kernel(x_ref, wqkv_ref, qT_ref, kT_ref, vT_ref, *,
                    num_heads, head_dim, hidden):
    # x_ref:    (TS, H)  bf16   (batch dim squeezed out by BlockSpec)
    # wqkv_ref: (H, 3H)  bf16   [Wq * 1/sqrt(d) | Wk | Wv]
    # qT/kT/vT: (nh, d, TS) bf16 outputs (head-major, transposed).
    y = jax.lax.dot_general(
        wqkv_ref[...], x_ref[...],
        dimension_numbers=(((0,), (1,)), ((), ())),
        preferred_element_type=jnp.float32)                 # (3H, TS) f32

    # Static per-head slab stores (sublane slices at f32-tile-aligned offsets).
    for h in range(num_heads):
        lo = h * head_dim
        qT_ref[h] = y[lo:lo + head_dim].astype(jnp.bfloat16)
        kT_ref[h] = y[hidden + lo:hidden + lo + head_dim].astype(jnp.bfloat16)
        vT_ref[h] = y[2 * hidden + lo:2 * hidden + lo + head_dim].astype(jnp.bfloat16)


# --------------------------------------------------------------------------
# Kernel B: per-head attention + concatenated out-projection + bias +
#           residual + LayerNorm, for one (batch, query-tile) grid step.
# --------------------------------------------------------------------------
def attn_kernel(x_ref, qT_ref, kT_ref, vT_ref, wd_ref, bd_ref, g_ref, beta_ref,
                out_ref, ctxT_ref, *, num_heads, head_dim, eps, approx_recip):
    # x_ref:    (TQ, H)    f32   residual / LayerNorm rows
    # qT_ref:   (nh, d, TQ) bf16 (already scaled by 1/sqrt(d))
    # kT_ref:   (nh, d, S)  bf16
    # vT_ref:   (nh, d, S)  bf16
    # wd_ref:   (H, H)      bf16 (in, out)
    # ctxT_ref: (H, TQ)     f32 scratch -- transposed context, head-major rows.

    def head_body(h, carry):
        qT_h = qT_ref[h]                                    # (d, TQ) bf16
        kT_h = kT_ref[h]                                    # (d, S)  bf16
        vT_h = vT_ref[h]                                    # (d, S)  bf16

        # scores[t, s] = sum_c q[t, c] * k[s, c]   (scale folded into Wq)
        scores = jax.lax.dot_general(
            qT_h, kT_h, dimension_numbers=(((0,), (0,)), ((), ())),
            preferred_element_type=jnp.float32)             # (TQ, S) f32

        # TODO(synk): optional attention mask not wired in (mask=None path).
        m = jnp.max(scores, axis=-1, keepdims=True)
        e = jnp.exp(scores - m)
        denom = jnp.sum(e, axis=-1, keepdims=True)
        if approx_recip:
            probs = e * pl.reciprocal(denom, approx=True)   # EUP slot
        else:
            probs = e / denom
        probs = probs.astype(jnp.bfloat16)

        # ctx_h^T = v_h^T @ probs^T (contract over S), stored head-major into
        # the transposed-context scratch: no (TQ, H) accumulator RMW per head.
        ctxT_h = jax.lax.dot_general(
            vT_h, probs, dimension_numbers=(((1,), (1,)), ((), ())),
            preferred_element_type=jnp.float32)             # (d, TQ) f32
        off = pl.multiple_of(h * head_dim, head_dim)
        ctxT_ref[pl.ds(off, head_dim), :] = ctxT_h
        return carry

    # Rolled loop: only one head's (TQ, S) softmax temporaries live at a time.
    jax.lax.fori_loop(0, num_heads, head_body, 0)

    # Single concatenated out-projection: contraction over the full hidden dim
    # (full MXU depth) instead of nh thin d-contraction matmuls.
    attn = jax.lax.dot_general(
        ctxT_ref[...].astype(jnp.bfloat16), wd_ref[...],
        dimension_numbers=(((0,), (0,)), ((), ())),
        preferred_element_type=jnp.float32)                 # (TQ, H) f32

    # Dense bias + (eval-mode) dropout identity + residual, in f32.
    attn = attn + bd_ref[...] + x_ref[...]

    # LayerNorm over the last dim (f32).
    mean = jnp.mean(attn, axis=-1, keepdims=True)
    cen = attn - mean
    var = jnp.mean(cen * cen, axis=-1, keepdims=True)
    normed = cen * jax.lax.rsqrt(var + eps)
    out_ref[...] = (normed * g_ref[...] + beta_ref[...]).astype(out_ref.dtype)


def multi_head_attention(x, params, num_heads, *, tile_q=128, approx_recip=True):
    B, S, H = x.shape
    assert H % num_heads == 0
    d = H // num_heads
    wq, wk, wv, wd, bd, gamma, beta = params

    # Query/sequence tile: sweep 128..512 on v5e/v6e (128 MiB VMEM); keep 128
    # (at most 256) on v7x (64 MiB VMEM).
    TQ = min(S, tile_q)
    assert S % TQ == 0, "sequence length must be divisible by the tile size"

    # Fold the 1/sqrt(d) score scale into Wq; fuse QKV weights; cast weights
    # and the matmul-stream copy of x to bf16 in the wrapper (single XLA ops).
    inv_sqrt_d = 1.0 / math.sqrt(d)
    wqkv = jnp.concatenate([wq * inv_sqrt_d, wk, wv], axis=1).astype(jnp.bfloat16)
    wd_b = wd.astype(jnp.bfloat16)
    x_b = x.astype(jnp.bfloat16)

    # ---------------- Kernel A: QKV projection (once per token) -------------
    qkv_out_shape = tuple(
        jax.ShapeDtypeStruct((B, num_heads, d, S), jnp.bfloat16) for _ in range(3))
    qkv_out_spec = pl.BlockSpec((None, num_heads, d, TQ), lambda b, i: (b, 0, 0, i))

    qT, kT, vT = pl.pallas_call(
        functools.partial(qkv_proj_kernel, num_heads=num_heads, head_dim=d,
                          hidden=H),
        out_shape=qkv_out_shape,
        grid_spec=pltpu.PrefetchScalarGridSpec(
            num_scalar_prefetch=0,
            grid=(B, S // TQ),
            in_specs=[
                pl.BlockSpec((None, TQ, H), lambda b, i: (b, i, 0)),   # x (bf16)
                pl.BlockSpec((H, 3 * H), lambda b, i: (0, 0),
                             pipeline_mode=pl.Buffered(1)),            # Wqkv
            ],
            out_specs=(qkv_out_spec, qkv_out_spec, qkv_out_spec),
        ),
        compiler_params=pltpu.CompilerParams(
            dimension_semantics=("parallel", "parallel"),
            vmem_limit_bytes=48 * 1024 * 1024,
        ),
    )(x_b, wqkv)

    # ------- Kernel B: attention + out-proj + bias + residual + LN ----------
    kernel = functools.partial(attn_kernel, num_heads=num_heads, head_dim=d,
                               eps=1e-6, approx_recip=approx_recip)

    return pl.pallas_call(
        kernel,
        out_shape=jax.ShapeDtypeStruct((B, S, H), x.dtype),
        grid_spec=pltpu.PrefetchScalarGridSpec(
            num_scalar_prefetch=0,
            grid=(B, S // TQ),
            in_specs=[
                pl.BlockSpec((None, TQ, H), lambda b, i: (b, i, 0)),            # x (f32)
                pl.BlockSpec((None, num_heads, d, TQ), lambda b, i: (b, 0, 0, i)),  # q^T
                pl.BlockSpec((None, num_heads, d, S), lambda b, i: (b, 0, 0, 0)),   # k^T
                pl.BlockSpec((None, num_heads, d, S), lambda b, i: (b, 0, 0, 0)),   # v^T
                pl.BlockSpec((H, H), lambda b, i: (0, 0),
                             pipeline_mode=pl.Buffered(1)),                     # Wd
                pl.BlockSpec((1, H), lambda b, i: (0, 0)),                      # dense bias
                pl.BlockSpec((1, H), lambda b, i: (0, 0)),                      # ln gamma
                pl.BlockSpec((1, H), lambda b, i: (0, 0)),                      # ln beta
            ],
            out_specs=pl.BlockSpec((None, TQ, H), lambda b, i: (b, i, 0)),
            scratch_shapes=[pltpu.VMEM((H, TQ), jnp.float32)],   # transposed ctx
        ),
        compiler_params=pltpu.CompilerParams(
            dimension_semantics=("parallel", "parallel"),
            vmem_limit_bytes=48 * 1024 * 1024,
        ),
    )(x, qT, kT, vT, wd_b, bd, gamma, beta)


def reference(x, params, num_heads):
    """Pure-JAX f32 reference mirroring the PyTorch forward (eval, mask=None)."""
    B, S, H = x.shape
    d = H // num_heads
    wq, wk, wv, wd, bd, gamma, beta = params

    def split(t):  # (B,S,H) -> (B,nh,S,d)
        return t.reshape(B, S, num_heads, d).transpose(0, 2, 1, 3)

    q = split(x @ wq)
    k = split(x @ wk)
    v = split(x @ wv)
    scores = jnp.einsum("bnsd,bntd->bnst", q, k) / math.sqrt(d)
    probs = jax.nn.softmax(scores, axis=-1)
    ctx = jnp.einsum("bnst,bntd->bnsd", probs, v)
    ctx = ctx.transpose(0, 2, 1, 3).reshape(B, S, H)
    attn = ctx @ wd + bd[0] + x
    mean = jnp.mean(attn, axis=-1, keepdims=True)
    var = jnp.mean((attn - mean) ** 2, axis=-1, keepdims=True)
    return (attn - mean) / jnp.sqrt(var + 1e-6) * gamma[0] + beta[0]


if __name__ == "__main__":
    B, S, H = 2, 8, 32
    num_heads = 4

    key = jax.random.PRNGKey(0)
    ks = jax.random.split(key, 6)
    scale = 1.0 / math.sqrt(H)
    x = jax.random.normal(ks[0], (B, S, H), dtype=jnp.float32)
    # Linear weights stored as (in, out) = torch_weight.T
    wq = jax.random.normal(ks[1], (H, H), dtype=jnp.float32) * scale
    wk = jax.random.normal(ks[2], (H, H), dtype=jnp.float32) * scale
    wv = jax.random.normal(ks[3], (H, H), dtype=jnp.float32) * scale
    wd = jax.random.normal(ks[4], (H, H), dtype=jnp.float32) * scale
    bd = jax.random.normal(ks[5], (1, H), dtype=jnp.float32) * 0.02
    gamma = jnp.ones((1, H), dtype=jnp.float32)
    beta = jnp.zeros((1, H), dtype=jnp.float32)

    params = (wq, wk, wv, wd, bd, gamma, beta)

    out = multi_head_attention(x, params, num_heads)
    out = jax.block_until_ready(out)

    ref = reference(x, params, num_heads)
    # bf16 matmul inputs + approx reciprocal vs. the pure-f32 reference:
    # bf16-level tolerance (real layout/indexing bugs show up as O(1)).
    np.testing.assert_allclose(np.asarray(out), np.asarray(ref),
                               rtol=5e-2, atol=5e-2)
    print("KERNEL_OK")
</pallas_src>

<mosaic_0001>
module attributes {stable_mosaic.version = 11 : i64} {
  func.func @qkv_proj_kernel(%arg0: i32, %arg1: i32, %arg2: memref<1x8x32xbf16, #tpu.memory_space<vmem>>, %arg3: memref<32x96xbf16, #tpu.memory_space<vmem>>, %arg4: memref<1x4x8x8xbf16, #tpu.memory_space<vmem>>, %arg5: memref<1x4x8x8xbf16, #tpu.memory_space<vmem>>, %arg6: memref<1x4x8x8xbf16, #tpu.memory_space<vmem>>) attributes {dimension_semantics = [#tpu.dimension_semantics<parallel>, #tpu.dimension_semantics<parallel>], iteration_bounds = array<i64: 2, 1>, scalar_prefetch = 0 : i64, scratch_operands = 0 : i64, tpu.core_type = #tpu.core_type<tc>, window_params = [{transform_indices = @transform_0, window_bounds = array<i64: 1, 8, 32>}, {pipeline_mode = #tpu.pipeline_mode<synchronous>, transform_indices = @transform_1, window_bounds = array<i64: 32, 96>}, {transform_indices = @transform_2, window_bounds = array<i64: 1, 4, 8, 8>}, {transform_indices = @transform_3, window_bounds = array<i64: 1, 4, 8, 8>}, {transform_indices = @transform_4, window_bounds = array<i64: 1, 4, 8, 8>}]} {
    %c0 = arith.constant 0 : index
    %c0_0 = arith.constant 0 : index
    %0 = vector.load %arg3[%c0, %c0_0] : memref<32x96xbf16, #tpu.memory_space<vmem>>, vector<32x96xbf16>
    %c0_1 = arith.constant 0 : index
    %c0_2 = arith.constant 0 : index
    %c0_3 = arith.constant 0 : index
    %1 = vector.load %arg2[%c0_1, %c0_2, %c0_3] : memref<1x8x32xbf16, #tpu.memory_space<vmem>>, vector<1x8x32xbf16>
    %2 = vector.shape_cast %1 : vector<1x8x32xbf16> to vector<8x32xbf16>
    %cst = arith.constant dense<0.000000e+00> : vector<96x8xf32>
    %3 = tpu.matmul %0, %2, %cst {dimension_numbers = #tpu.dot_dimension_numbers<[0], [1], [1], [0], [0, 1, 1, 0], [], []>} : vector<32x96xbf16>, vector<8x32xbf16>, vector<96x8xf32> -> vector<96x8xf32>
    %4 = vector.extract_strided_slice %3 {offsets = [0, 0], sizes = [8, 8], strides = [1, 1]} : vector<96x8xf32> to vector<8x8xf32>
    %5 = arith.truncf %4 : vector<8x8xf32> to vector<8x8xbf16>
    %c0_4 = arith.constant 0 : index
    %c0_5 = arith.constant 0 : index
    %c0_6 = arith.constant 0 : index
    %c0_7 = arith.constant 0 : index
    %6 = vector.load %arg4[%c0_4, %c0_5, %c0_6, %c0_7] : memref<1x4x8x8xbf16, #tpu.memory_space<vmem>>, vector<1x1x8x8xbf16>
    %7 = vector.shape_cast %6 : vector<1x1x8x8xbf16> to vector<8x8xbf16>
    %8 = vector.shape_cast %5 : vector<8x8xbf16> to vector<1x1x8x8xbf16>
    tpu.vector_store %arg4[%c0_4, %c0_5, %c0_6, %c0_7], %8 {strides = array<i32>} : memref<1x4x8x8xbf16, #tpu.memory_space<vmem>>, vector<1x1x8x8xbf16>,
    %9 = vector.extract_strided_slice %3 {offsets = [32, 0], sizes = [8, 8], strides = [1, 1]} : vector<96x8xf32> to vector<8x8xf32>
    %10 = arith.truncf %9 : vector<8x8xf32> to vector<8x8xbf16>
    %c0_8 = arith.constant 0 : index
    %c0_9 = arith.constant 0 : index
    %c0_10 = arith.constant 0 : index
    %c0_11 = arith.constant 0 : index
    %11 = vector.load %arg5[%c0_8, %c0_9, %c0_10, %c0_11] : memref<1x4x8x8xbf16, #tpu.memory_space<vmem>>, vector<1x1x8x8xbf16>
    %12 = vector.shape_cast %11 : vector<1x1x8x8xbf16> to vector<8x8xbf16>
    %13 = vector.shape_cast %10 : vector<8x8xbf16> to vector<1x1x8x8xbf16>
    tpu.vector_store %arg5[%c0_8, %c0_9, %c0_10, %c0_11], %13 {strides = array<i32>} : memref<1x4x8x8xbf16, #tpu.memory_space<vmem>>, vector<1x1x8x8xbf16>,
    %14 = vector.extract_strided_slice %3 {offsets = [64, 0], sizes = [8, 8], strides = [1, 1]} : vector<96x8xf32> to vector<8x8xf32>
    %15 = arith.truncf %14 : vector<8x8xf32> to vector<8x8xbf16>
    %c0_12 = arith.constant 0 : index
    %c0_13 = arith.constant 0 : index
    %c0_14 = arith.constant 0 : index
    %c0_15 = arith.constant 0 : index
    %16 = vector.load %arg6[%c0_12, %c0_13, %c0_14, %c0_15] : memref<1x4x8x8xbf16, #tpu.memory_space<vmem>>, vector<1x1x8x8xbf16>
    %17 = vector.shape_cast %16 : vector<1x1x8x8xbf16> to vector<8x8xbf16>
    %18 = vector.shape_cast %15 : vector<8x8xbf16> to vector<1x1x8x8xbf16>
    tpu.vector_store %arg6[%c0_12, %c0_13, %c0_14, %c0_15], %18 {strides = array<i32>} : memref<1x4x8x8xbf16, #tpu.memory_space<vmem>>, vector<1x1x8x8xbf16>,
    %19 = vector.extract_strided_slice %3 {offsets = [8, 0], sizes = [8, 8], strides = [1, 1]} : vector<96x8xf32> to vector<8x8xf32>
    %20 = arith.truncf %19 : vector<8x8xf32> to vector<8x8xbf16>
    %c0_16 = arith.constant 0 : index
    %c1 = arith.constant 1 : index
    %c0_17 = arith.constant 0 : index
    %c0_18 = arith.constant 0 : index
    %21 = vector.load %arg4[%c0_16, %c1, %c0_17, %c0_18] : memref<1x4x8x8xbf16, #tpu.memory_space<vmem>>, vector<1x1x8x8xbf16>
    %22 = vector.shape_cast %21 : vector<1x1x8x8xbf16> to vector<8x8xbf16>
    %23 = vector.shape_cast %20 : vector<8x8xbf16> to vector<1x1x8x8xbf16>
    tpu.vector_store %arg4[%c0_16, %c1, %c0_17, %c0_18], %23 {strides = array<i32>} : memref<1x4x8x8xbf16, #tpu.memory_space<vmem>>, vector<1x1x8x8xbf16>,
    %24 = vector.extract_strided_slice %3 {offsets = [40, 0], sizes = [8, 8], strides = [1, 1]} : vector<96x8xf32> to vector<8x8xf32>
    %25 = arith.truncf %24 : vector<8x8xf32> to vector<8x8xbf16>
    %c0_19 = arith.constant 0 : index
    %c1_20 = arith.constant 1 : index
    %c0_21 = arith.constant 0 : index
    %c0_22 = arith.constant 0 : index
    %26 = vector.load %arg5[%c0_19, %c1_20, %c0_21, %c0_22] : memref<1x4x8x8xbf16, #tpu.memory_space<vmem>>, vector<1x1x8x8xbf16>
    %27 = vector.shape_cast %26 : vector<1x1x8x8xbf16> to vector<8x8xbf16>
    %28 = vector.shape_cast %25 : vector<8x8xbf16> to vector<1x1x8x8xbf16>
    tpu.vector_store %arg5[%c0_19, %c1_20, %c0_21, %c0_22], %28 {strides = array<i32>} : memref<1x4x8x8xbf16, #tpu.memory_space<vmem>>, vector<1x1x8x8xbf16>,
    %29 = vector.extract_strided_slice %3 {offsets = [72, 0], sizes = [8, 8], strides = [1, 1]} : vector<96x8xf32> to vector<8x8xf32>
    %30 = arith.truncf %29 : vector<8x8xf32> to vector<8x8xbf16>
    %c0_23 = arith.constant 0 : index
    %c1_24 = arith.constant 1 : index
    %c0_25 = arith.constant 0 : index
    %c0_26 = arith.constant 0 : index
    %31 = vector.load %arg6[%c0_23, %c1_24, %c0_25, %c0_26] : memref<1x4x8x8xbf16, #tpu.memory_space<vmem>>, vector<1x1x8x8xbf16>
    %32 = vector.shape_cast %31 : vector<1x1x8x8xbf16> to vector<8x8xbf16>
    %33 = vector.shape_cast %30 : vector<8x8xbf16> to vector<1x1x8x8xbf16>
    tpu.vector_store %arg6[%c0_23, %c1_24, %c0_25, %c0_26], %33 {strides = array<i32>} : memref<1x4x8x8xbf16, #tpu.memory_space<vmem>>, vector<1x1x8x8xbf16>,
    %34 = vector.extract_strided_slice %3 {offsets = [16, 0], sizes = [8, 8], strides = [1, 1]} : vector<96x8xf32> to vector<8x8xf32>
    %35 = arith.truncf %34 : vector<8x8xf32> to vector<8x8xbf16>
    %c0_27 = arith.constant 0 : index
    %c2 = arith.constant 2 : index
    %c0_28 = arith.constant 0 : index
    %c0_29 = arith.constant 0 : index
    %36 = vector.load %arg4[%c0_27, %c2, %c0_28, %c0_29] : memref<1x4x8x8xbf16, #tpu.memory_space<vmem>>, vector<1x1x8x8xbf16>
    %37 = vector.shape_cast %36 : vector<1x1x8x8xbf16> to vector<8x8xbf16>
    %38 = vector.shape_cast %35 : vector<8x8xbf16> to vector<1x1x8x8xbf16>
    tpu.vector_store %arg4[%c0_27, %c2, %c0_28, %c0_29], %38 {strides = array<i32>} : memref<1x4x8x8xbf16, #tpu.memory_space<vmem>>, vector<1x1x8x8xbf16>,
    %39 = vector.extract_strided_slice %3 {offsets = [48, 0], sizes = [8, 8], strides = [1, 1]} : vector<96x8xf32> to vector<8x8xf32>
    %40 = arith.truncf %39 : vector<8x8xf32> to vector<8x8xbf16>
    %c0_30 = arith.constant 0 : index
    %c2_31 = arith.constant 2 : index
    %c0_32 = arith.constant 0 : index
    %c0_33 = arith.constant 0 : index
    %41 = vector.load %arg5[%c0_30, %c2_31, %c0_32, %c0_33] : memref<1x4x8x8xbf16, #tpu.memory_space<vmem>>, vector<1x1x8x8xbf16>
    %42 = vector.shape_cast %41 : vector<1x1x8x8xbf16> to vector<8x8xbf16>
    %43 = vector.shape_cast %40 : vector<8x8xbf16> to vector<1x1x8x8xbf16>
    tpu.vector_store %arg5[%c0_30, %c2_31, %c0_32, %c0_33], %43 {strides = array<i32>} : memref<1x4x8x8xbf16, #tpu.memory_space<vmem>>, vector<1x1x8x8xbf16>,
    %44 = vector.extract_strided_slice %3 {offsets = [80, 0], sizes = [8, 8], strides = [1, 1]} : vector<96x8xf32> to vector<8x8xf32>
    %45 = arith.truncf %44 : vector<8x8xf32> to vector<8x8xbf16>
    %c0_34 = arith.constant 0 : index
    %c2_35 = arith.constant 2 : index
    %c0_36 = arith.constant 0 : index
    %c0_37 = arith.constant 0 : index
    %46 = vector.load %arg6[%c0_34, %c2_35, %c0_36, %c0_37] : memref<1x4x8x8xbf16, #tpu.memory_space<vmem>>, vector<1x1x8x8xbf16>
    %47 = vector.shape_cast %46 : vector<1x1x8x8xbf16> to vector<8x8xbf16>
    %48 = vector.shape_cast %45 : vector<8x8xbf16> to vector<1x1x8x8xbf16>
    tpu.vector_store %arg6[%c0_34, %c2_35, %c0_36, %c0_37], %48 {strides = array<i32>} : memref<1x4x8x8xbf16, #tpu.memory_space<vmem>>, vector<1x1x8x8xbf16>,
    %49 = vector.extract_strided_slice %3 {offsets = [24, 0], sizes = [8, 8], strides = [1, 1]} : vector<96x8xf32> to vector<8x8xf32>
    %50 = arith.truncf %49 : vector<8x8xf32> to vector<8x8xbf16>
    %c0_38 = arith.constant 0 : index
    %c3 = arith.constant 3 : index
    %c0_39 = arith.constant 0 : index
    %c0_40 = arith.constant 0 : index
    %51 = vector.load %arg4[%c0_38, %c3, %c0_39, %c0_40] : memref<1x4x8x8xbf16, #tpu.memory_space<vmem>>, vector<1x1x8x8xbf16>
    %52 = vector.shape_cast %51 : vector<1x1x8x8xbf16> to vector<8x8xbf16>
    %53 = vector.shape_cast %50 : vector<8x8xbf16> to vector<1x1x8x8xbf16>
    tpu.vector_store %arg4[%c0_38, %c3, %c0_39, %c0_40], %53 {strides = array<i32>} : memref<1x4x8x8xbf16, #tpu.memory_space<vmem>>, vector<1x1x8x8xbf16>,
    %54 = vector.extract_strided_slice %3 {offsets = [56, 0], sizes = [8, 8], strides = [1, 1]} : vector<96x8xf32> to vector<8x8xf32>
    %55 = arith.truncf %54 : vector<8x8xf32> to vector<8x8xbf16>
    %c0_41 = arith.constant 0 : index
    %c3_42 = arith.constant 3 : index
    %c0_43 = arith.constant 0 : index
    %c0_44 = arith.constant 0 : index
    %56 = vector.load %arg5[%c0_41, %c3_42, %c0_43, %c0_44] : memref<1x4x8x8xbf16, #tpu.memory_space<vmem>>, vector<1x1x8x8xbf16>
    %57 = vector.shape_cast %56 : vector<1x1x8x8xbf16> to vector<8x8xbf16>
    %58 = vector.shape_cast %55 : vector<8x8xbf16> to vector<1x1x8x8xbf16>
    tpu.vector_store %arg5[%c0_41, %c3_42, %c0_43, %c0_44], %58 {strides = array<i32>} : memref<1x4x8x8xbf16, #tpu.memory_space<vmem>>, vector<1x1x8x8xbf16>,
    %59 = vector.extract_strided_slice %3 {offsets = [88, 0], sizes = [8, 8], strides = [1, 1]} : vector<96x8xf32> to vector<8x8xf32>
    %60 = arith.truncf %59 : vector<8x8xf32> to vector<8x8xbf16>
    %c0_45 = arith.constant 0 : index
    %c3_46 = arith.constant 3 : index
    %c0_47 = arith.constant 0 : index
    %c0_48 = arith.constant 0 : index
    %61 = vector.load %arg6[%c0_45, %c3_46, %c0_47, %c0_48] : memref<1x4x8x8xbf16, #tpu.memory_space<vmem>>, vector<1x1x8x8xbf16>
    %62 = vector.shape_cast %61 : vector<1x1x8x8xbf16> to vector<8x8xbf16>
    %63 = vector.shape_cast %60 : vector<8x8xbf16> to vector<1x1x8x8xbf16>
    tpu.vector_store %arg6[%c0_45, %c3_46, %c0_47, %c0_48], %63 {strides = array<i32>} : memref<1x4x8x8xbf16, #tpu.memory_space<vmem>>, vector<1x1x8x8xbf16>,
    return
  }
  func.func @transform_0(%arg0: i32, %arg1: i32) -> (i32, i32, i32) {
    %c0_i32 = arith.constant 0 : i32
    %c0_i32_0 = arith.constant 0 : i32
    return %arg0, %arg1, %c0_i32 : i32, i32, i32
  }
  func.func @transform_1(%arg0: i32, %arg1: i32) -> (i32, i32) {
    %c0_i32 = arith.constant 0 : i32
    %c0_i32_0 = arith.constant 0 : i32
    %c0_i32_1 = arith.constant 0 : i32
    return %c0_i32, %c0_i32_0 : i32, i32
  }
  func.func @transform_2(%arg0: i32, %arg1: i32) -> (i32, i32, i32, i32) {
    %c0_i32 = arith.constant 0 : i32
    %c0_i32_0 = arith.constant 0 : i32
    %c0_i32_1 = arith.constant 0 : i32
    return %arg0, %c0_i32, %c0_i32_0, %arg1 : i32, i32, i32, i32
  }
  func.func @transform_3(%arg0: i32, %arg1: i32) -> (i32, i32, i32, i32) {
    %c0_i32 = arith.constant 0 : i32
    %c0_i32_0 = arith.constant 0 : i32
    %c0_i32_1 = arith.constant 0 : i32
    return %arg0, %c0_i32, %c0_i32_0, %arg1 : i32, i32, i32, i32
  }
  func.func @transform_4(%arg0: i32, %arg1: i32) -> (i32, i32, i32, i32) {
    %c0_i32 = arith.constant 0 : i32
    %c0_i32_0 = arith.constant 0 : i32
    %c0_i32_1 = arith.constant 0 : i32
    return %arg0, %c0_i32, %c0_i32_0, %arg1 : i32, i32, i32, i32
  }
}

</mosaic_0001>

<llo_original>
// kernel: tpu_custom_call.1
$region0: #{tpu_custom_call.1}
  #allocation0 [shape = 'u32[]', space=smem, size = 0x4, offset = 0x4, fixed_abs, tag = 'smem constant byte address 0x4 - core index']
  #allocation1 [shape = 'u32[144,128]{1,0:T(1,128)}', space=vmem, size = 0x12000, scoped, tag = 'internal scratch']
  %s0 = inlined_call_operand.hbm [shape: bf16[2,8,32], index: 0, kind: input, shape index: {}]
  %s1 = inlined_call_operand.hbm [shape: bf16[32,96], index: 1, kind: input, shape index: {}]
  %s2 = inlined_call_operand.hbm [shape: bf16[2,4,8,8], index: 2, kind: output, shape index: {0}]
  %s3 = inlined_call_operand.hbm [shape: bf16[2,4,8,8], index: 3, kind: output, shape index: {1}]
  %s4 = inlined_call_operand.hbm [shape: bf16[2,4,8,8], index: 4, kind: output, shape index: {2}]
  %5 = xla_tuple %s2, %s3, %s4
  %s6 = sld [smem:[#allocation0]]
  $region65: #{tpu_custom_call.1} parent=0
    _
  %s8 = ssub.s32 1, %s6
  %s9 = scalar_select 0, %s8, %s6
  $region1: #{tpu_custom_call.1} parent=0
    #allocation2 [shape = 'u8[4096]{0}', space=vmem, size = 0x1000, scoped, tag = 'input window, operand 0']
    #allocation3 [shape = 's32[2]{0}', space=sflag, size = 0x8, scoped, tag = 'scoped memory for tpu_custom_call.1']
    #allocation4 [shape = 's32[2]{0}', space=sflag, size = 0x8, scoped, tag = 'scoped memory for tpu_custom_call.1']
    #allocation5 [shape = 'u8[8192]{0}', space=vmem, size = 0x2000, scoped, tag = 'input window, operand 1, single buffered']
    #allocation6 [shape = 's32[1]{0}', space=sflag, size = 0x4, scoped, tag = 'scoped memory for tpu_custom_call.1']
    #allocation7 [shape = 'u8[16384]{0}', space=vmem, size = 0x4000, scoped, tag = 'output window, operand 0']
    #allocation8 [shape = 'u8[16384]{0}', space=vmem, size = 0x4000, scoped, tag = 'output window, operand 1']
    #allocation9 [shape = 's32[2]{0}', space=sflag, size = 0x8, scoped, tag = 'scoped memory for tpu_custom_call.1']
    #allocation10 [shape = 'u8[16384]{0}', space=vmem, size = 0x4000, scoped, tag = 'output window, operand 2']
    %10 = vsyncpa [#allocation3], 0
    %s11 = scalar_lea.sflag [#allocation3], 1
    %12 = vsyncpa %s11, 0
    %13 = vsyncpa [#allocation6], 0
    %14 = vsyncpa [#allocation4], 0
    %s15 = scalar_lea.sflag [#allocation4], 1
    %16 = vsyncpa %s15, 0
    %17 = vsyncpa [#allocation9], 0
    %s18 = scalar_lea.sflag [#allocation9], 1
    %19 = vsyncpa %s18, 0
    loop: start=0, step=1, limit=4
    $region2: #{tpu_custom_call.1} parent=1 // loop_pre_header
      _
    $region3: #{tpu_custom_call.1} parent=1 // loop_header
      %s21 = sphi 0, %s25
      %p22 = scmp.ge.s32.totalorder %s21, 4
      %s28 = sphi 0, %s40
      %s29 = sphi 0, %s36
      %s30 = sphi 0, %s28
      %s31 = sphi 0, %s29
      %s32 = sphi 0, %s30
      %s33 = sphi 0, %s31
      %s45 = sphi 0, %s47
      %s48 = sphi 0, %s45
      %s49 = sphi 0, %s48
      %s65 = sphi 0, %s49
      %s69 = sphi 0, %s69
      %s71 = sphi 0, %s69
      %s72 = sphi 0, %s71
      %s86 = sphi 0, %s72
      %s94 = sphi 0, %s96
      %s97 = sphi 0, %s94
      %s98 = sphi 0, %s97
      %s114 = sphi 0, %s98
      %s122 = sphi 0, %s124
      %s125 = sphi 0, %s122
      %s126 = sphi 0, %s125
      %s142 = sphi 0, %s126
      %s150 = sphi 0, %s152
      %s153 = sphi 0, %s150
      %s154 = sphi 0, %s153
      %s170 = sphi 0, %s154
    $region4: #{tpu_custom_call.1} parent=1 // loop_header_branch
      %24 = sbr.rel (%p22) target = $region8
    $region5: #{tpu_custom_call.1} parent=1 // loop_body
      %s26 = ssub.s32 %s21, 1
      %s27 = ssub.s32 %s21, 2
      %s34 = sadd.s32 1, %s29
      %p35 = scmp.ge.s32.totalorder %s34, 1
      %s36 = scalar_select %p35, 0, %s34
      %s37 = sadd.s32 1, %s28
      %s38 = scalar_select %p35, %s37, %s28
      %p39 = scmp.ge.s32.totalorder %s38, 2
      %s40 = scalar_select %p39, 0, %s38
      %s41 = ssub.s32 %s28, %s40
      %s42 = ssub.s32 %s29, %s36
      %s43 = sor.u32 %s41, %s42
      %p44 = scmp.eq.s32.totalorder %s43, 0
      %s46 = sadd.s32 %s45, 1
      %s47 = scalar_select %p44, %s45, %s46
      %p50 = pneg %p44
      %p51 = scmp.eq.s32.totalorder %s21, 1
      %p52 = por %p50, %p51
      %p53 = scmp.ne.s32.totalorder %s45, %s48
      %p54 = scmp.eq.s32.totalorder %s21, 0
      %p55 = por %p53, %p54
      %p56 = scmp.ne.s32.totalorder %s45, %s48
      %p57 = scmp.eq.s32.totalorder %s26, 1
      %p58 = por %p56, %p57
      %p59 = scmp.ne.s32.totalorder %s48, %s49
      %p60 = scmp.eq.s32.totalorder %s26, 0
      %p61 = por %p59, %p60
      %p62 = scmp.ne.s32.totalorder %s48, %s49
      %p63 = scmp.eq.s32.totalorder %s27, 1
      %p64 = por %p62, %p63
      %p66 = scmp.ne.s32.totalorder %s49, %s65
      %p67 = scmp.eq.s32.totalorder %s27, 0
      %p68 = por %p66, %p67
      %s70 = sadd.s32 %s69, 1
      %p73 = scmp.eq.s32.totalorder %s21, 1
      %p74 = scmp.ne.s32.totalorder %s69, %s71
      %p75 = scmp.eq.s32.totalorder %s21, 0
      %p76 = por %p74, %p75
      %p77 = scmp.ne.s32.totalorder %s69, %s71
      %p78 = scmp.eq.s32.totalorder %s26, 1
      %p79 = por %p77, %p78
      %p80 = scmp.ne.s32.totalorder %s71, %s72
      %p81 = scmp.eq.s32.totalorder %s26, 0
      %p82 = por %p80, %p81
      %p83 = scmp.ne.s32.totalorder %s71, %s72
      %p84 = scmp.eq.s32.totalorder %s27, 1
      %p85 = por %p83, %p84
      %p87 = scmp.ne.s32.totalorder %s72, %s86
      %p88 = scmp.eq.s32.totalorder %s27, 0
      %p89 = por %p87, %p88
      %s90 = ssub.s32 %s28, %s40
      %s91 = ssub.s32 %s29, %s36
      %s92 = sor.u32 %s90, %s91
      %p93 = scmp.eq.s32.totalorder %s92, 0
      %s95 = sadd.s32 %s94, 1
      %s96 = scalar_select %p93, %s94, %s95
      %p99 = pneg %p93
      %p100 = scmp.eq.s32.totalorder %s21, 1
      %p101 = por %p99, %p100
      %p102 = scmp.ne.s32.totalorder %s94, %s97
      %p103 = scmp.eq.s32.totalorder %s21, 0
      %p104 = por %p102, %p103
      %p105 = scmp.ne.s32.totalorder %s94, %s97
      %p106 = scmp.eq.s32.totalorder %s26, 1
      %p107 = por %p105, %p106
      %p108 = scmp.ne.s32.totalorder %s97, %s98
      %p109 = scmp.eq.s32.totalorder %s26, 0
      %p110 = por %p108, %p109
      %p111 = scmp.ne.s32.totalorder %s97, %s98
      %p112 = scmp.eq.s32.totalorder %s27, 1
      %p113 = por %p111, %p112
      %p115 = scmp.ne.s32.totalorder %s98, %s114
      %p116 = scmp.eq.s32.totalorder %s27, 0
      %p117 = por %p115, %p116
      %s118 = ssub.s32 %s28, %s40
      %s119 = ssub.s32 %s29, %s36
      %s120 = sor.u32 %s118, %s119
      %p121 = scmp.eq.s32.totalorder %s120, 0
      %s123 = sadd.s32 %s122, 1
      %s124 = scalar_select %p121, %s122, %s123
      %p127 = pneg %p121
      %p128 = scmp.eq.s32.totalorder %s21, 1
      %p129 = por %p127, %p128
      %p130 = scmp.ne.s32.totalorder %s122, %s125
      %p131 = scmp.eq.s32.totalorder %s21, 0
      %p132 = por %p130, %p131
      %p133 = scmp.ne.s32.totalorder %s122, %s125
      %p134 = scmp.eq.s32.totalorder %s26, 1
      %p135 = por %p133, %p134
      %p136 = scmp.ne.s32.totalorder %s125, %s126
      %p137 = scmp.eq.s32.totalorder %s26, 0
      %p138 = por %p136, %p137
      %p139 = scmp.ne.s32.totalorder %s125, %s126
      %p140 = scmp.eq.s32.totalorder %s27, 1
      %p141 = por %p139, %p140
      %p143 = scmp.ne.s32.totalorder %s126, %s142
      %p144 = scmp.eq.s32.totalorder %s27, 0
      %p145 = por %p143, %p144
      %s146 = ssub.s32 %s28, %s40
      %s147 = ssub.s32 %s29, %s36
      %s148 = sor.u32 %s146, %s147
      %p149 = scmp.eq.s32.totalorder %s148, 0
      %s151 = sadd.s32 %s150, 1
      %s152 = scalar_select %p149, %s150, %s151
      %p155 = pneg %p149
      %p156 = scmp.eq.s32.totalorder %s21, 1
      %p157 = por %p155, %p156
      %p158 = scmp.ne.s32.totalorder %s150, %s153
      %p159 = scmp.eq.s32.totalorder %s21, 0
      %p160 = por %p158, %p159
      %p161 = scmp.ne.s32.totalorder %s150, %s153
      %p162 = scmp.eq.s32.totalorder %s26, 1
      %p163 = por %p161, %p162
      %p164 = scmp.ne.s32.totalorder %s153, %s154
      %p165 = scmp.eq.s32.totalorder %s26, 0
      %p166 = por %p164, %p165
      %p167 = scmp.ne.s32.totalorder %s153, %s154
      %p168 = scmp.eq.s32.totalorder %s27, 1
      %p169 = por %p167, %p168
      %p171 = scmp.ne.s32.totalorder %s154, %s170
      %p172 = scmp.eq.s32.totalorder %s27, 0
      %p173 = por %p171, %p172
      %p174 = scmp.le.s32.totalorder 1, %s21
      %p175 = scmp.lt.s32.totalorder %s21, 3
      %p176 = pnand %p174, %p175
      %p177 = pneg %p176
      // Predicated region
      $region9: #{tpu_custom_call.1} parent=5 // pred_check
        _
      $region10: #{tpu_custom_call.1} parent=5 // pred_check_branch
        %179 = sbr.rel (%p176) target = $region12
      $region11: #{tpu_custom_call.1} parent=5 // pred_region
        %s180 = ssub.s32 %s21, 1
        // Predicated region
        $region13: #{tpu_custom_call.1} parent=11 // pred_check
          %p181 = pneg %p82
        $region14: #{tpu_custom_call.1} parent=11 // pred_check_branch
          %183 = sbr.rel (%p181) target = $region16
        $region15: #{tpu_custom_call.1} parent=11 // pred_region
          %s185 = ssub.s32 256, 256
          %186 = vsyncadd [#allocation6], %s185
          %s187 = sshll.u32 [#allocation5], 4
          %s188 = int_to_ptr.vmem [resolvable:$true] %s187
          %193 = dma.hbm_to_vmem [thread:$0]  %s1, 256, %s188, [#allocation6], 64, 64, 4
        $region16: #{tpu_custom_call.1} parent=11 // pred_fallthru
          _
      $region12: #{tpu_custom_call.1} parent=5 // pred_fallthru
        _
      %p194 = scmp.lt.s32.totalorder %s21, 2
      // Predicated region
      $region17: #{tpu_custom_call.1} parent=5 // pred_check
        %p195 = pneg %p194
      $region18: #{tpu_custom_call.1} parent=5 // pred_check_branch
        %197 = sbr.rel (%p195) target = $region20
      $region19: #{tpu_custom_call.1} parent=5 // pred_region
        // Predicated region
        $region21: #{tpu_custom_call.1} parent=19 // pred_check
          %p198 = pneg %p55
        $region22: #{tpu_custom_call.1} parent=19 // pred_check_branch
          %200 = sbr.rel (%p198) target = $region24
        $region23: #{tpu_custom_call.1} parent=19 // pred_region
          %s201 = sand.u32 %s45, 1
          %s202 = scalar_lea.sflag [#allocation3], %s201
          %s203 = sand.u32 %s45, 1
          %s204 = smul.addr %s203, 4
          %s205 = scalar_lea.vmem [#allocation2], %s204
          %s207 = ssub.s32 64, 64
          %208 = vsyncadd %s202, %s207
          %s209 = sadd.s32 %s29, %s28
          %s210 = smul.addr %s209, 64
          %s211 = scalar_lea.hbm %s0, %s210
          %s213 = sshll.u32 %s205, 4
          %s214 = int_to_ptr.vmem [resolvable:$true] %s213
          %216 = dma.hbm_to_vmem [thread:$0]  %s211, 64, %s214, %s202
        $region24: #{tpu_custom_call.1} parent=19 // pred_fallthru
          _
      $region20: #{tpu_custom_call.1} parent=5 // pred_fallthru
        _
      %p217 = scmp.le.s32.totalorder 1, %s21
      %p218 = scmp.lt.s32.totalorder %s21, 3
      %p219 = pnand %p217, %p218
      %p220 = pneg %p219
      // Predicated region
      $region25: #{tpu_custom_call.1} parent=5 // pred_check
        _
      $region26: #{tpu_custom_call.1} parent=5 // pred_check_branch
        %222 = sbr.rel (%p219) target = $region28
      $region27: #{tpu_custom_call.1} parent=5 // pred_region
        %s223 = ssub.s32 %s21, 1
        %s224 = sand.u32 %s48, 1
        %s225 = scalar_lea.sflag [#allocation3], %s224
        %s226 = sand.u32 %s48, 1
        %s227 = smul.addr %s226, 4
        %s228 = scalar_lea.vmem [#allocation2], %s227
        // Predicated region
        $region29: #{tpu_custom_call.1} parent=27 // pred_check
          %p229 = pneg %p61
        $region30: #{tpu_custom_call.1} parent=27 // pred_check_branch
          %231 = sbr.rel (%p229) target = $region32
        $region31: #{tpu_custom_call.1} parent=27 // pred_region
          %232 = dma.done %s225, 64
        $region32: #{tpu_custom_call.1} parent=27 // pred_fallthru
          _
        // Predicated region
        $region33: #{tpu_custom_call.1} parent=27 // pred_check
          %p233 = pneg %p82
        $region34: #{tpu_custom_call.1} parent=27 // pred_check_branch
          %235 = sbr.rel (%p233) target = $region36
        $region35: #{tpu_custom_call.1} parent=27 // pred_region
          %236 = dma.done [#allocation6], 256
        $region36: #{tpu_custom_call.1} parent=27 // pred_fallthru
          _
        %s237 = sand.u32 %s48, 1
        %s238 = scalar_lea.sflag [#allocation3], %s237
        %s239 = sand.u32 %s48, 1
        %s240 = smul.addr %s239, 4
        %s241 = scalar_lea.vmem [#allocation2], %s240
        %p242 = pneg %p61
        %p243 = pneg %p58
        %p244 = pneg %p82
        %p245 = pneg %p79
        %p246 = pneg %p110
        %p247 = pneg %p107
        %s248 = sand.u32 %s97, 1
        %s249 = scalar_lea.sflag [#allocation4], %s248
        %s250 = sand.u32 %s97, 1
        %s251 = smul.addr %s250, 16
        %s252 = scalar_lea.vmem [#allocation7], %s251
        %p253 = pneg %p138
        %p254 = pneg %p135
        %s255 = sand.u32 %s26, 1
        %s256 = scalar_lea.sflag [#allocation9], %s255
        %s257 = sand.u32 %s125, 1
        %s258 = smul.addr %s257, 16
        %s259 = scalar_lea.vmem [#allocation8], %s258
        %p260 = pneg %p166
        %p261 = pneg %p163
        %s262 = sand.u32 %s26, 1
        %s263 = scalar_lea.sflag [#allocation9], %s262
        %s264 = sand.u32 %s153, 1
        %s265 = smul.addr %s264, 16
        %s266 = scalar_lea.vmem [#allocation10], %s265
        %v268 = vld [vmem:[#allocation5] sm:$0xf]
        %v269 = vld [vmem:[#allocation5 + $0x4] sm:$0xf]
        %v270 = vld [vmem:[#allocation5 + $0x8] sm:$0xf]
        %v271 = vld [vmem:[#allocation5 + $0xc] sm:$0xf]
        %v272 = vld [vmem:[%s228] sm:$0xf]
        %v277 = vunpack.c.l.b16 %v268
        %v278 = vunpack.c.l.b16 %v269
        %v279 = vunpack.c.l.b16 %v270
        %v280 = vunpack.c.l.b16 %v271
        %v281 = vpack.c.b16 %v278, %v277
        %v282 = vpack.c.b16 %v280, %v279
        %285 = vxpose.xlu0.c.b16.start [1/8] %v281, 128
        %286 = vxpose.xlu0.c.b16.cont [2/8] %v282, 128
        %287 = vxpose.xlu0.c.b16.cont [3/8] 0, 128
        %288 = vxpose.xlu0.c.b16.cont [4/8] 0, 128
        %289 = vxpose.xlu0.c.b16.cont [5/8] 0, 128
        %290 = vxpose.xlu0.c.b16.cont [6/8] 0, 128
        %291 = vxpose.xlu0.c.b16.cont [7/8] 0, 128
        %292 = vxpose.xlu0.c.b16.end [8/8] 0, 128
        %v293 = vpop.trf.xlu0
        %v294 = vpop.trf.xlu0
        %v295 = vpop.trf.xlu0
        %v296 = vpop.trf.xlu0
        %v297 = vpop.trf.xlu0
        %v298 = vpop.trf.xlu0
        %v299 = vpop.trf.xlu0
        %v300 = vpop.trf.xlu0
        %vm301 = vcmask 261120
        %v303 = vsel %vm301, %v293, 0
        %v306 = vsel %vm301, %v294, 0
        %v309 = vsel %vm301, %v295, 0
        %v312 = vsel %vm301, %v296, 0
        %v315 = vsel %vm301, %v297, 0
        %v318 = vsel %vm301, %v298, 0
        %v321 = vsel %vm301, %v272, 0
        %323 = vmatprep.subr.bf16.mxu0 0
        %324 = vmatpush1.bf16.xpose.msra.mxu0 0
        %325 = vmatprep.subr.bf16.mxu0 0
        %326 = vmatpush1.bf16.xpose.msra.mxu0 0
        %327 = vmatprep.subr.bf16.mxu0 0
        %328 = vmatpush1.bf16.xpose.msra.mxu0 0
        %329 = vmatprep.subr.bf16.mxu0 0
        %330 = vmatpush1.bf16.xpose.msra.mxu0 0
        %331 = vmatprep.subr.bf16.mxu0 0
        %332 = vmatpush1.bf16.xpose.msra.mxu0 0
        %333 = vmatprep.subr.bf16.mxu0 0
        %334 = vmatpush1.bf16.xpose.msra.mxu0 0
        %335 = vmatprep.subr.bf16.mxu0 0
        %336 = vmatpush1.bf16.xpose.msra.mxu0 0
        %337 = vmatprep.subr.bf16.mxu0 0
        %338 = vmatpush1.bf16.xpose.msra.mxu0 %v321
        %339 = vmatprep.subr.bf16.mxu0 0
        %340 = vmatpush2.bf16.xpose.msra.mxu0 0
        %341 = vmatprep.subr.bf16.mxu0 0
        %342 = vmatpush2.bf16.xpose.msra.mxu0 0
        %343 = vmatprep.subr.bf16.mxu0 0
        %344 = vmatpush2.bf16.xpose.msra.mxu0 0
        %345 = vmatprep.subr.bf16.mxu0 0
        %346 = vmatpush2.bf16.xpose.msra.mxu0 0
        %347 = vmatprep.subr.bf16.mxu0 0
        %348 = vmatpush2.bf16.xpose.msra.mxu0 0
        %349 = vmatprep.subr.bf16.mxu0 0
        %350 = vmatpush2.bf16.xpose.msra.mxu0 0
        %351 = vmatprep.subr.bf16.mxu0 0
        %352 = vmatpush2.bf16.xpose.msra.mxu0 0
        %353 = vmatprep.subr.bf16.mxu0 0
        %354 = vmatpush2.bf16.xpose.msra.mxu0 0
        %355 = vmatprep.mubr.bf16.mxu0 0
        %356 = vmatmul.mubr.bf16.gmra.mxu0 %v303
        %v357 = vpop.f32.mrf.mxu0
        %v358 = vadd.f32 0.0, %v357
        %v359 = vpop.f32.mrf.mxu0
        %v360 = vpop.f32.mrf.mxu0
        %v361 = vadd.f32 0.0, %v360
        %v362 = vpop.f32.mrf.mxu0
        %363 = vmatprep.mubr.bf16.mxu0 0
        %364 = vmatmul.mubr.bf16.gmra.mxu0 %v306
        %v365 = vpop.f32.mrf.mxu0
        %v366 = vadd.f32 0.0, %v365
        %v367 = vpop.f32.mrf.mxu0
        %v368 = vpop.f32.mrf.mxu0
        %v369 = vadd.f32 0.0, %v368
        %v370 = vpop.f32.mrf.mxu0
        %371 = vmatprep.mubr.bf16.mxu0 0
        %372 = vmatmul.mubr.bf16.gmra.mxu0 %v309
        %v373 = vpop.f32.mrf.mxu0
        %v374 = vadd.f32 0.0, %v373
        %v375 = vpop.f32.mrf.mxu0
        %v376 = vpop.f32.mrf.mxu0
        %v377 = vadd.f32 0.0, %v376
        %v378 = vpop.f32.mrf.mxu0
        %379 = vmatprep.mubr.bf16.mxu0 0
        %380 = vmatmul.mubr.bf16.gmra.mxu0 %v312
        %v381 = vpop.f32.mrf.mxu0
        %v382 = vadd.f32 0.0, %v381
        %v383 = vpop.f32.mrf.mxu0
        %v384 = vpop.f32.mrf.mxu0
        %v385 = vadd.f32 0.0, %v384
        %v386 = vpop.f32.mrf.mxu0
        %387 = vmatprep.mubr.bf16.mxu0 0
        %388 = vmatmul.mubr.bf16.gmra.mxu0 %v315
        %v389 = vpop.f32.mrf.mxu0
        %v390 = vadd.f32 0.0, %v389
        %v391 = vpop.f32.mrf.mxu0
        %v392 = vpop.f32.mrf.mxu0
        %v393 = vadd.f32 0.0, %v392
        %v394 = vpop.f32.mrf.mxu0
        %395 = vmatprep.mubr.bf16.mxu0 0
        %396 = vmatmul.mubr.bf16.gmra.mxu0 %v318
        %v397 = vpop.f32.mrf.mxu0
        %v398 = vadd.f32 0.0, %v397
        %v399 = vpop.f32.mrf.mxu0
        %v400 = vpop.f32.mrf.mxu0
        %v401 = vadd.f32 0.0, %v400
        %v402 = vpop.f32.mrf.mxu0
        %403 = vdwg.mxu0
        %v404 = vpack.c.bf16 %v358, %v358
        %vm405 = vcmask 60416
        %406 = vst.msk [vmem:[%s252] sm:$0xf] %vm405, %v404
        %v407 = vpack.c.bf16 %v374, %v374
        %408 = vst.msk [vmem:[%s259] sm:$0xf] %vm405, %v407
        %v409 = vpack.c.bf16 %v390, %v390
        %410 = vst.msk [vmem:[%s266] sm:$0xf] %vm405, %v409
        %v411 = vpack.c.bf16 %v361, %v361
        %s412 = scalar_lea.vmem %s252, 4 [#allocation7]
        %413 = vst.msk [vmem:[%s412] sm:$0xf] %vm405, %v411
        %v414 = vpack.c.bf16 %v377, %v377
        %s415 = scalar_lea.vmem %s259, 4 [#allocation8]
        %416 = vst.msk [vmem:[%s415] sm:$0xf] %vm405, %v414
        %v417 = vpack.c.bf16 %v393, %v393
        %s418 = scalar_lea.vmem %s266, 4 [#allocation10]
        %419 = vst.msk [vmem:[%s418] sm:$0xf] %vm405, %v417
        %v420 = vpack.c.bf16 %v366, %v366
        %s421 = scalar_lea.vmem %s252, 8 [#allocation7]
        %422 = vst.msk [vmem:[%s421] sm:$0xf] %vm405, %v420
        %v423 = vpack.c.bf16 %v382, %v382
        %s424 = scalar_lea.vmem %s259, 8 [#allocation8]
        %425 = vst.msk [vmem:[%s424] sm:$0xf] %vm405, %v423
        %v426 = vpack.c.bf16 %v398, %v398
        %s427 = scalar_lea.vmem %s266, 8 [#allocation10]
        %428 = vst.msk [vmem:[%s427] sm:$0xf] %vm405, %v426
        %v429 = vpack.c.bf16 %v369, %v369
        %s430 = scalar_lea.vmem %s252, 12 [#allocation7]
        %431 = vst.msk [vmem:[%s430] sm:$0xf] %vm405, %v429
        %v432 = vpack.c.bf16 %v385, %v385
        %s433 = scalar_lea.vmem %s259, 12 [#allocation8]
        %434 = vst.msk [vmem:[%s433] sm:$0xf] %vm405, %v432
        %v435 = vpack.c.bf16 %v401, %v401
        %s436 = scalar_lea.vmem %s266, 12 [#allocation10]
        %437 = vst.msk [vmem:[%s436] sm:$0xf] %vm405, %v435
        %s438 = sand.u32 %s97, 1
        %s439 = scalar_lea.sflag [#allocation4], %s438
        %s440 = sand.u32 %s97, 1
        %s441 = smul.addr %s440, 16
        %s442 = scalar_lea.vmem [#allocation7], %s441
        %s443 = sand.u32 %s26, 1
        %s444 = scalar_lea.sflag [#allocation9], %s443
        %s445 = sand.u32 %s125, 1
        %s446 = smul.addr %s445, 16
        %s447 = scalar_lea.vmem [#allocation8], %s446
        %s448 = sand.u32 %s26, 1
        %s449 = scalar_lea.sflag [#allocation9], %s448
        %s450 = sand.u32 %s153, 1
        %s451 = smul.addr %s450, 16
        %s452 = scalar_lea.vmem [#allocation10], %s451
        // Predicated region
        $region37: #{tpu_custom_call.1} parent=27 // pred_check
          %p453 = pneg %p107
        $region38: #{tpu_custom_call.1} parent=27 // pred_check_branch
          %455 = sbr.rel (%p453) target = $region40
        $region39: #{tpu_custom_call.1} parent=27 // pred_region
          %s457 = ssub.s32 256, 256
          %458 = vsyncadd %s439, %s457
          %s459 = smul.addr %s30, 4
          %s460 = sadd.s32 %s31, %s459
          %s461 = smul.addr %s460, 64
          %s462 = scalar_lea.hbm %s2, %s461
          %s463 = sshll.u32 %s442, 4
          %s464 = int_to_ptr.vmem [resolvable:$true] %s463
          %469 = dma.vmem_to_hbm [thread:$0]  %s464, 256, %s462, %s439, 64, 64, 4
        $region40: #{tpu_custom_call.1} parent=27 // pred_fallthru
          _
        // Predicated region
        $region41: #{tpu_custom_call.1} parent=27 // pred_check
          %p470 = pneg %p135
        $region42: #{tpu_custom_call.1} parent=27 // pred_check_branch
          %472 = sbr.rel (%p470) target = $region44
        $region43: #{tpu_custom_call.1} parent=27 // pred_region
          %s474 = ssub.s32 256, 256
          %475 = vsyncadd %s444, %s474
          %s476 = smul.addr %s30, 4
          %s477 = sadd.s32 %s31, %s476
          %s478 = smul.addr %s477, 64
          %s479 = scalar_lea.hbm %s3, %s478
          %s480 = sshll.u32 %s447, 4
          %s481 = int_to_ptr.vmem [resolvable:$true] %s480
          %486 = dma.vmem_to_hbm [thread:$0]  %s481, 256, %s479, %s444, 64, 64, 4
        $region44: #{tpu_custom_call.1} parent=27 // pred_fallthru
          _
        // Predicated region
        $region45: #{tpu_custom_call.1} parent=27 // pred_check
          %p487 = pneg %p163
        $region46: #{tpu_custom_call.1} parent=27 // pred_check_branch
          %489 = sbr.rel (%p487) target = $region48
        $region47: #{tpu_custom_call.1} parent=27 // pred_region
          %s491 = ssub.s32 256, 256
          %492 = vsyncadd %s449, %s491
          %s493 = smul.addr %s30, 4
          %s494 = sadd.s32 %s31, %s493
          %s495 = smul.addr %s494, 64
          %s496 = scalar_lea.hbm %s4, %s495
          %s497 = sshll.u32 %s452, 4
          %s498 = int_to_ptr.vmem [resolvable:$true] %s497
          %503 = dma.vmem_to_hbm [thread:$0]  %s498, 256, %s496, %s449, 64, 64, 4
        $region48: #{tpu_custom_call.1} parent=27 // pred_fallthru
          _
      $region28: #{tpu_custom_call.1} parent=5 // pred_fallthru
        _
      %p504 = scmp.le.s32.totalorder 2, %s21
      // Predicated region
      $region49: #{tpu_custom_call.1} parent=5 // pred_check
        %p505 = pneg %p504
      $region50: #{tpu_custom_call.1} parent=5 // pred_check_branch
        %507 = sbr.rel (%p505) target = $region52
      $region51: #{tpu_custom_call.1} parent=5 // pred_region
        %s508 = ssub.s32 %s21, 2
        // Predicated region
        $region53: #{tpu_custom_call.1} parent=51 // pred_check
          %p509 = pneg %p113
        $region54: #{tpu_custom_call.1} parent=51 // pred_check_branch
          %511 = sbr.rel (%p509) target = $region56
        $region55: #{tpu_custom_call.1} parent=51 // pred_region
          %s512 = sand.u32 %s98, 1
          %s513 = scalar_lea.sflag [#allocation4], %s512
          %s514 = sand.u32 %s98, 1
          %s515 = smul.addr %s514, 16
          %s516 = scalar_lea.vmem [#allocation7], %s515
          %517 = dma.done %s513, 256
        $region56: #{tpu_custom_call.1} parent=51 // pred_fallthru
          _
        // Predicated region
        $region57: #{tpu_custom_call.1} parent=51 // pred_check
          %p518 = pneg %p141
        $region58: #{tpu_custom_call.1} parent=51 // pred_check_branch
          %520 = sbr.rel (%p518) target = $region60
        $region59: #{tpu_custom_call.1} parent=51 // pred_region
          %s521 = sand.u32 %s27, 1
          %s522 = scalar_lea.sflag [#allocation9], %s521
          %s523 = sand.u32 %s126, 1
          %s524 = smul.addr %s523, 16
          %s525 = scalar_lea.vmem [#allocation8], %s524
          %526 = dma.done %s522, 256
        $region60: #{tpu_custom_call.1} parent=51 // pred_fallthru
          _
        // Predicated region
        $region61: #{tpu_custom_call.1} parent=51 // pred_check
          %p527 = pneg %p169
        $region62: #{tpu_custom_call.1} parent=51 // pred_check_branch
          %529 = sbr.rel (%p527) target = $region64
        $region63: #{tpu_custom_call.1} parent=51 // pred_region
          %s530 = sand.u32 %s27, 1
          %s531 = scalar_lea.sflag [#allocation9], %s530
          %s532 = sand.u32 %s154, 1
          %s533 = smul.addr %s532, 16
          %s534 = scalar_lea.vmem [#allocation10], %s533
          %535 = dma.done %s531, 256
        $region64: #{tpu_custom_call.1} parent=51 // pred_fallthru
          _
      $region52: #{tpu_custom_call.1} parent=5 // pred_fallthru
        _
    $region6: #{tpu_custom_call.1} parent=1 // loop_footer
      %s25 = sadd.s32 1, %s21
    $region7: #{tpu_custom_call.1} parent=1 // loop_footer_branch
      %20 = sbr.rel target = $region3
    $region8: #{tpu_custom_call.1} parent=1 // loop_exit
      _
    %536 = vsyncpa [#allocation3], 1
    %s537 = scalar_lea.sflag [#allocation3], 1
    %538 = vsyncpa %s537, 1
    %539 = vsyncpa [#allocation6], 1
    %540 = vsyncpa [#allocation4], 1
    %s541 = scalar_lea.sflag [#allocation4], 1
    %542 = vsyncpa %s541, 1
    %543 = vsyncpa [#allocation9], 1
    %s544 = scalar_lea.sflag [#allocation9], 1
    %545 = vsyncpa %s544, 1

</llo_original>
